<compile_context>
chip_gen: v7x
topology: tpu7x:2x2x1
jax: 0.10.0
libtpu: 0.0.40
codegen_flags: <defaults>
</compile_context>

<pallas_src>
import numpy as np
import jax
import jax.numpy as jnp
from jax import lax
from jax.experimental import pallas as pl
from jax.experimental.pallas import tpu as pltpu

# ----- model hyper-parameters (small, deterministic) -----
DEPTH      = 3
N_INTERNAL = 2 ** DEPTH - 1        # 7 internal gating nodes
N_LEAVES   = 2 ** DEPTH            # 8 leaves
N_ACTIONS  = 4                     # number of devices (actor logits dim)
D_IN       = 32                    # observation feature dim
D_HID      = 32                    # critic hidden dim
BATCH      = 8                     # batch of observations (one sublane tile)

# ----- fused / packed layout constants -----
N_FUSE1 = N_INTERNAL + D_HID       # 39: [gate pre-acts | critic hidden pre-acts]
N_FUSE2 = N_ACTIONS + 1            # 5:  [action logits | value]
LANES   = 128                      # lane-dense slabs

# parameter-slab row offsets; every multi-row region starts on an 8-row boundary
ROW_W1   = 0                       # rows  0:32  fused first-stage weight [wg | w1]   lanes 0:39
ROW_R    = 32                      # rows 32:39  right-branch mask R (7, 8)           lanes 0:8
ROW_L    = 40                      # rows 40:47  left-branch  mask L (7, 8)           lanes 0:8
ROW_LEAF = 48                      # rows 48:56  leaf-logit table (8, 5-padded)       lanes 0:4
ROW_W2C  = 56                      # rows 56:88  critic head w2 (32, 5-padded)        lane  4
ROW_B1   = 88                      # row  88     fused first-stage bias [bg | b1]     lanes 0:39
ROW_B2   = 89                      # row  89     second-stage bias [0,0,0,0,b2]       lanes 0:5
N_ROWS   = 96                      # pad to multiple of 8 sublanes

# packed-output lane offsets (single (B, 128) f32 output)
OUT_P    = 0                       # lanes 0:4   action logits p
OUT_V    = N_ACTIONS               # lane  4     critic value v
OUT_LEAF = N_FUSE2                 # lanes 5:13  leaf routing probabilities
OUT_PATH = OUT_LEAF + N_LEAVES     # lane  13    greedy leaf index (stored as f32)


def _log_sigmoid_pair(z):
    """Numerically stable (log_sigmoid(z), log_sigmoid(-z)); shares the softplus term."""
    common = jnp.log1p(jnp.exp(-jnp.abs(z)))             # softplus(-|z|) in (0, log 2]
    return jnp.minimum(z, 0.0) - common, jnp.minimum(-z, 0.0) - common


def _actor_critic_kernel(x_ref, params_ref, out_ref):
    x = x_ref[...]                                                    # (B, 32) f32
    B = x.shape[0]

    # ---- stage 1: one fused MXU pass shared by actor gates and critic hidden ----
    w1 = params_ref[ROW_W1:ROW_W1 + D_IN, 0:N_FUSE1]                  # (32, 39)
    b1 = params_ref[ROW_B1:ROW_B1 + 1, 0:N_FUSE1]                     # (1, 39)
    z_all = jnp.dot(x, w1, preferred_element_type=jnp.float32) + b1   # (B, 39)

    z = z_all[:, 0:N_INTERNAL]                                        # (B, 7) gate pre-acts
    h = jnp.maximum(z_all[:, N_INTERNAL:N_FUSE1], 0.0)                # (B, 32) ReLU hidden

    # ---- actor routing, vectorized in log space (no per-leaf loop / lane shuffles) ----
    ls_pos, ls_neg = _log_sigmoid_pair(z)                             # log P(right), log P(left)
    r_mask = params_ref[ROW_R:ROW_R + N_INTERNAL, 0:N_LEAVES]         # (7, 8)
    l_mask = params_ref[ROW_L:ROW_L + N_INTERNAL, 0:N_LEAVES]         # (7, 8)
    log_leaf = (jnp.dot(ls_pos, r_mask, preferred_element_type=jnp.float32)
                + jnp.dot(ls_neg, l_mask, preferred_element_type=jnp.float32))
    leaf_probs = jnp.exp(log_leaf)                                    # (B, 8), rows sum to 1

    # ---- stage 2: two tiny aligned MXU passes summed into [p | v] on lanes 0:5 ----
    w2a = params_ref[ROW_LEAF:ROW_LEAF + N_LEAVES, 0:N_FUSE2]         # (8, 5)  leaf table | 0
    w2b = params_ref[ROW_W2C:ROW_W2C + D_HID, 0:N_FUSE2]              # (32, 5) 0 | critic w2
    b2 = params_ref[ROW_B2:ROW_B2 + 1, 0:N_FUSE2]                     # (1, 5)
    pv = (jnp.dot(leaf_probs, w2a, preferred_element_type=jnp.float32)
          + jnp.dot(h, w2b, preferred_element_type=jnp.float32) + b2)  # (B, 5)

    # ---- greedy leaf index (path) computed in-kernel (first argmax over 8 lanes) ----
    idx = lax.broadcasted_iota(jnp.int32, (B, N_LEAVES), 1)
    mx = jnp.max(leaf_probs, axis=-1, keepdims=True)
    path = jnp.min(jnp.where(leaf_probs >= mx, idx, N_LEAVES),
                   axis=-1, keepdims=True)                            # (B, 1) int32

    # ---- single lane-dense store: [p | v | leaf_probs | path | 0-pad] = (B, 128) ----
    pad = jnp.zeros((B, LANES - (N_FUSE2 + N_LEAVES + 1)), jnp.float32)
    out_ref[...] = jnp.concatenate(
        [pv, leaf_probs, path.astype(jnp.float32), pad], axis=-1)


# ---------------------------------------------------------------------------
# host-side parameter construction / packing
# ---------------------------------------------------------------------------
def _routing_masks():
    """R[n,l]=1 if leaf l goes RIGHT at internal node n on its path; L likewise for LEFT."""
    r = np.zeros((N_INTERNAL, N_LEAVES), np.float32)
    l = np.zeros((N_INTERNAL, N_LEAVES), np.float32)
    for leaf in range(N_LEAVES):
        node = 0
        for d in range(DEPTH):
            bit = (leaf >> (DEPTH - 1 - d)) & 1        # 1 = right branch
            (r if bit else l)[node, leaf] = 1.0
            node = 2 * node + 1 + bit
    return r, l


def init_params(key):
    """Deterministic synthetic parameters (shapes implied by the module's submodules)."""
    ks = jax.random.split(key, 4)
    scale = 0.1
    wg   = scale * jax.random.normal(ks[0], (D_IN, N_INTERNAL), jnp.float32)
    bg   = jnp.zeros((N_INTERNAL,), jnp.float32)
    leaf = scale * jax.random.normal(ks[1], (N_LEAVES, N_ACTIONS), jnp.float32)
    w1   = scale * jax.random.normal(ks[2], (D_IN, D_HID), jnp.float32)
    b1   = jnp.zeros((D_HID,), jnp.float32)
    w2   = scale * jax.random.normal(ks[3], (D_HID, 1), jnp.float32)
    b2   = jnp.zeros((), jnp.float32)
    return wg, bg, leaf, w1, b1, w2, b2


def pack_params(params):
    """Pack all actor+critic parameters into one lane-dense (96, 128) f32 slab."""
    wg, bg, leaf, w1, b1, w2, b2 = (np.asarray(p, np.float32) for p in params)
    r_mask, l_mask = _routing_masks()
    slab = np.zeros((N_ROWS, LANES), np.float32)
    slab[ROW_W1:ROW_W1 + D_IN, 0:N_INTERNAL]           = wg
    slab[ROW_W1:ROW_W1 + D_IN, N_INTERNAL:N_FUSE1]     = w1
    slab[ROW_R:ROW_R + N_INTERNAL, 0:N_LEAVES]         = r_mask
    slab[ROW_L:ROW_L + N_INTERNAL, 0:N_LEAVES]         = l_mask
    slab[ROW_LEAF:ROW_LEAF + N_LEAVES, 0:N_ACTIONS]    = leaf           # leaf-logit table
    slab[ROW_W2C:ROW_W2C + D_HID, N_ACTIONS:N_FUSE2]   = w2             # critic head
    slab[ROW_B1, 0:N_INTERNAL]                         = bg
    slab[ROW_B1, N_INTERNAL:N_FUSE1]                   = b1
    slab[ROW_B2, N_ACTIONS]                            = b2
    return jnp.asarray(slab)


def actor_critic_forward(x, param_slab):
    """Mirrors ActorCritic.forward: returns (p, path, devices, v)."""
    B = x.shape[0]
    vmem = pl.BlockSpec(memory_space=pltpu.MemorySpace.VMEM)
    packed = pl.pallas_call(
        _actor_critic_kernel,
        out_shape=jax.ShapeDtypeStruct((B, LANES), jnp.float32),
        in_specs=[vmem, vmem],
        out_specs=vmem,
    )(x, param_slab)
    p    = packed[:, OUT_P:OUT_P + N_ACTIONS]
    v    = packed[:, OUT_V:OUT_V + 1]
    path = packed[:, OUT_PATH].astype(jnp.int32)
    # TODO(synk): the torch tree returns a discrete node-traversal `path` (and a device
    # list for ClusTree); here `path` is the greedy leaf index and `devices` has no
    # Pallas equivalent.
    devices = None
    return p, path, devices, v


# ---------------------------------------------------------------------------
# pure-JAX reference of the same synthetic model (sanity check in __main__)
# ---------------------------------------------------------------------------
def reference_forward(x, params):
    wg, bg, leaf, w1, b1, w2, b2 = params
    gates = jax.nn.sigmoid(x @ wg + bg)                       # (B, 7) = P(go right)
    cols = []
    for lf in range(N_LEAVES):
        prob = jnp.ones((x.shape[0],), jnp.float32)
        node = 0
        for d in range(DEPTH):
            bit = (lf >> (DEPTH - 1 - d)) & 1
            g = gates[:, node]
            prob = prob * (g if bit else (1.0 - g))
            node = 2 * node + 1 + bit
        cols.append(prob)
    leaf_probs = jnp.stack(cols, axis=-1)                     # (B, 8)
    p = leaf_probs @ leaf                                     # (B, 4)
    h = jnp.maximum(x @ w1 + b1, 0.0)
    v = h @ w2 + b2                                           # (B, 1)
    return p, v


if __name__ == "__main__":
    key = jax.random.PRNGKey(0)
    k_x, k_p = jax.random.split(key)
    x = jax.random.normal(k_x, (BATCH, D_IN), jnp.float32)
    params = init_params(k_p)
    slab = pack_params(params)

    p, path, devices, v = actor_critic_forward(x, slab)
    jax.block_until_ready((p, path, v))

    # shape / value checks against the pure-JAX reference
    p_ref, v_ref = reference_forward(x, params)
    assert p.shape == (BATCH, N_ACTIONS)
    assert v.shape == (BATCH, 1)
    assert path.shape == (BATCH,)
    assert bool(jnp.all(jnp.isfinite(p))) and bool(jnp.all(jnp.isfinite(v)))
    assert bool(jnp.all((path >= 0) & (path < N_LEAVES)))
    assert float(jnp.max(jnp.abs(p - p_ref))) < 1e-2
    assert float(jnp.max(jnp.abs(v - v_ref))) < 1e-2
    print("KERNEL_OK")
</pallas_src>

<mosaic_0001>
module attributes {stable_mosaic.version = 11 : i64} {
  func.func @_actor_critic_kernel(%arg0: memref<8x32xf32, #tpu.memory_space<vmem>>, %arg1: memref<96x128xf32, #tpu.memory_space<vmem>>, %arg2: memref<8x128xf32, #tpu.memory_space<vmem>>) attributes {dimension_semantics = [], scalar_prefetch = 0 : i64, scratch_operands = 0 : i64, tpu.core_type = #tpu.core_type<tc>} {
    %c0 = arith.constant 0 : index
    %c0_0 = arith.constant 0 : index
    %0 = vector.load %arg0[%c0, %c0_0] : memref<8x32xf32, #tpu.memory_space<vmem>>, vector<8x32xf32>
    %c0_1 = arith.constant 0 : index
    %c0_2 = arith.constant 0 : index
    %1 = vector.load %arg1[%c0_1, %c0_2] : memref<96x128xf32, #tpu.memory_space<vmem>>, vector<32x39xf32>
    %c88 = arith.constant 88 : index
    %c0_3 = arith.constant 0 : index
    %2 = vector.load %arg1[%c88, %c0_3] : memref<96x128xf32, #tpu.memory_space<vmem>>, vector<1x39xf32>
    %cst = arith.constant dense<0.000000e+00> : vector<8x39xf32>
    %3 = tpu.matmul %0, %1, %cst {dimension_numbers = #tpu.dot_dimension_numbers<[1], [0], [0], [1], [0, 0, 1, 1], [], []>} : vector<8x32xf32>, vector<32x39xf32>, vector<8x39xf32> -> vector<8x39xf32>
    %4 = vector.broadcast %2 : vector<1x39xf32> to vector<8x39xf32>
    %5 = arith.addf %3, %4 : vector<8x39xf32>
    %6 = vector.extract_strided_slice %5 {offsets = [0, 0], sizes = [8, 7], strides = [1, 1]} : vector<8x39xf32> to vector<8x7xf32>
    %7 = vector.extract_strided_slice %5 {offsets = [0, 7], sizes = [8, 32], strides = [1, 1]} : vector<8x39xf32> to vector<8x32xf32>
    %cst_4 = arith.constant 0.000000e+00 : f32
    %8 = vector.broadcast %cst_4 : f32 to vector<8x32xf32>
    %9 = arith.maximumf %7, %8 : vector<8x32xf32>
    %10 = math.absf %6 : vector<8x7xf32>
    %cst_5 = arith.constant 0.000000e+00 : f32
    %11 = vector.broadcast %cst_5 : f32 to vector<8x7xf32>
    %12 = arith.subf %11, %10 : vector<8x7xf32>
    %13 = math.exp %12 : vector<8x7xf32>
    %14 = math.log1p %13 : vector<8x7xf32>
    %cst_6 = arith.constant 0.000000e+00 : f32
    %15 = vector.broadcast %cst_6 : f32 to vector<8x7xf32>
    %16 = arith.minimumf %6, %15 : vector<8x7xf32>
    %17 = arith.subf %16, %14 : vector<8x7xf32>
    %cst_7 = arith.constant 0.000000e+00 : f32
    %18 = vector.broadcast %cst_7 : f32 to vector<8x7xf32>
    %19 = arith.subf %18, %6 : vector<8x7xf32>
    %cst_8 = arith.constant 0.000000e+00 : f32
    %20 = vector.broadcast %cst_8 : f32 to vector<8x7xf32>
    %21 = arith.minimumf %19, %20 : vector<8x7xf32>
    %22 = arith.subf %21, %14 : vector<8x7xf32>
    %c32 = arith.constant 32 : index
    %c0_9 = arith.constant 0 : index
    %23 = vector.load %arg1[%c32, %c0_9] : memref<96x128xf32, #tpu.memory_space<vmem>>, vector<7x8xf32>
    %c40 = arith.constant 40 : index
    %c0_10 = arith.constant 0 : index
    %24 = vector.load %arg1[%c40, %c0_10] : memref<96x128xf32, #tpu.memory_space<vmem>>, vector<7x8xf32>
    %cst_11 = arith.constant dense<0.000000e+00> : vector<8x8xf32>
    %25 = tpu.matmul %17, %23, %cst_11 {dimension_numbers = #tpu.dot_dimension_numbers<[1], [0], [0], [1], [0, 0, 1, 1], [], []>} : vector<8x7xf32>, vector<7x8xf32>, vector<8x8xf32> -> vector<8x8xf32>
    %cst_12 = arith.constant dense<0.000000e+00> : vector<8x8xf32>
    %26 = tpu.matmul %22, %24, %cst_12 {dimension_numbers = #tpu.dot_dimension_numbers<[1], [0], [0], [1], [0, 0, 1, 1], [], []>} : vector<8x7xf32>, vector<7x8xf32>, vector<8x8xf32> -> vector<8x8xf32>
    %27 = arith.addf %25, %26 : vector<8x8xf32>
    %28 = math.exp %27 : vector<8x8xf32>
    %c48 = arith.constant 48 : index
    %c0_13 = arith.constant 0 : index
    %29 = vector.load %arg1[%c48, %c0_13] : memref<96x128xf32, #tpu.memory_space<vmem>>, vector<8x5xf32>
    %c56 = arith.constant 56 : index
    %c0_14 = arith.constant 0 : index
    %30 = vector.load %arg1[%c56, %c0_14] : memref<96x128xf32, #tpu.memory_space<vmem>>, vector<32x5xf32>
    %c89 = arith.constant 89 : index
    %c0_15 = arith.constant 0 : index
    %31 = vector.load %arg1[%c89, %c0_15] : memref<96x128xf32, #tpu.memory_space<vmem>>, vector<1x5xf32>
    %cst_16 = arith.constant dense<0.000000e+00> : vector<8x5xf32>
    %32 = tpu.matmul %28, %29, %cst_16 {dimension_numbers = #tpu.dot_dimension_numbers<[1], [0], [0], [1], [0, 0, 1, 1], [], []>} : vector<8x8xf32>, vector<8x5xf32>, vector<8x5xf32> -> vector<8x5xf32>
    %cst_17 = arith.constant dense<0.000000e+00> : vector<8x5xf32>
    %33 = tpu.matmul %9, %30, %cst_17 {dimension_numbers = #tpu.dot_dimension_numbers<[1], [0], [0], [1], [0, 0, 1, 1], [], []>} : vector<8x32xf32>, vector<32x5xf32>, vector<8x5xf32> -> vector<8x5xf32>
    %34 = arith.addf %32, %33 : vector<8x5xf32>
    %35 = vector.broadcast %31 : vector<1x5xf32> to vector<8x5xf32>
    %36 = arith.addf %34, %35 : vector<8x5xf32>
    %37 = tpu.iota {dimensions = array<i32: 1>} : vector<8x8xi32>
    %cst_18 = arith.constant dense<0xFF800000> : vector<8xf32>
    %38 = vector.multi_reduction <maximumf>, %28, %cst_18 [1] : vector<8x8xf32> to vector<8xf32>
    %39 = vector.shape_cast %38 : vector<8xf32> to vector<8x1xf32>
    %40 = vector.broadcast %39 : vector<8x1xf32> to vector<8x8xf32>
    %41 = arith.cmpf oge, %28, %40 : vector<8x8xf32>
    %c8_i32 = arith.constant 8 : i32
    %42 = vector.broadcast %c8_i32 : i32 to vector<8x8xi32>
    %43 = arith.select %41, %37, %42 : vector<8x8xi1>, vector<8x8xi32>
    %cst_19 = arith.constant dense<2147483647> : vector<8xi32>
    %44 = vector.multi_reduction <minsi>, %43, %cst_19 [1] : vector<8x8xi32> to vector<8xi32>
    %45 = vector.shape_cast %44 : vector<8xi32> to vector<8x1xi32>
    %cst_20 = arith.constant 0.000000e+00 : f32
    %46 = vector.broadcast %cst_20 : f32 to vector<8x114xf32>
    %47 = arith.sitofp %45 : vector<8x1xi32> to vector<8x1xf32>
    %48 = tpu.concatenate %36, %28, %47, %46 in 1 : vector<8x5xf32>, vector<8x8xf32>, vector<8x1xf32>, vector<8x114xf32> -> vector<8x128xf32>
    %c0_21 = arith.constant 0 : index
    %c0_22 = arith.constant 0 : index
    %49 = vector.load %arg2[%c0_21, %c0_22] : memref<8x128xf32, #tpu.memory_space<vmem>>, vector<8x128xf32>
    tpu.vector_store %arg2[%c0_21, %c0_22], %48 {strides = array<i32>} : memref<8x128xf32, #tpu.memory_space<vmem>>, vector<8x128xf32>,
    return
  }
}

</mosaic_0001>

<llo_original>
// kernel: tpu_custom_call.1
$region0: #{tpu_custom_call.1}
  #allocation0 [shape = 'u32[]', space=smem, size = 0x4, offset = 0x4, fixed_abs, tag = 'smem constant byte address 0x4 - core index']
  #allocation1 [shape = 'u32[144,128]{1,0:T(1,128)}', space=vmem, size = 0x12000, scoped, tag = 'internal scratch']
  %s0 = inlined_call_operand.hbm [shape: f32[8,32], index: 0, kind: input, shape index: {}]
  %s1 = inlined_call_operand.hbm [shape: f32[96,128], index: 1, kind: input, shape index: {}]
  %s2 = inlined_call_operand.hbm [shape: f32[8,128], index: 2, kind: output, shape index: {}]
  %s3 = sld [smem:[#allocation0]]
  $region26: #{tpu_custom_call.1} parent=0
    _
  %s5 = ssub.s32 1, %s3
  %s6 = scalar_select 0, %s5, %s3
  $region1: #{tpu_custom_call.1} parent=0
    #allocation2 [shape = 'u8[4096]{0}', space=vmem, size = 0x1000, scoped, tag = 'input window, operand 0, single buffered']
    #allocation3 [shape = 's32[1]{0}', space=sflag, size = 0x4, scoped, tag = 'scoped memory for tpu_custom_call.1']
    #allocation4 [shape = 's32[1]{0}', space=sflag, size = 0x4, scoped, tag = 'scoped memory for tpu_custom_call.1']
    #allocation5 [shape = 'u8[49152]{0}', space=vmem, size = 0xc000, scoped, tag = 'input window, operand 1, single buffered']
    #allocation6 [shape = 's32[1]{0}', space=sflag, size = 0x4, scoped, tag = 'scoped memory for tpu_custom_call.1']
    #allocation7 [shape = 'u8[4096]{0}', space=vmem, size = 0x1000, scoped, tag = 'output window, operand 0, single buffered']
    %7 = vsyncpa [#allocation3], 0
    %8 = vsyncpa [#allocation6], 0
    %9 = vsyncpa [#allocation4], 0
    // Predicated region
    $region2: #{tpu_custom_call.1} parent=1 // pred_check
      _
    $region3: #{tpu_custom_call.1} parent=1 // pred_check_branch
      %11 = sbr.rel (0) target = $region5
    $region4: #{tpu_custom_call.1} parent=1 // pred_region
      %s13 = ssub.s32 128, 128
      %14 = vsyncadd [#allocation3], %s13
      %s16 = sshll.u32 [#allocation2], 4
      %s17 = int_to_ptr.vmem [resolvable:$true] %s16
      %19 = dma.hbm_to_vmem [thread:$0]  %s0, 128, %s17, [#allocation3]
    $region5: #{tpu_custom_call.1} parent=1 // pred_fallthru
      _
    // Predicated region
    $region6: #{tpu_custom_call.1} parent=1 // pred_check
      _
    $region7: #{tpu_custom_call.1} parent=1 // pred_check_branch
      %21 = sbr.rel (0) target = $region9
    $region8: #{tpu_custom_call.1} parent=1 // pred_region
      %s23 = ssub.s32 1536, 1536
      %24 = vsyncadd [#allocation6], %s23
      %s25 = sshll.u32 [#allocation5], 4
      %s26 = int_to_ptr.vmem [resolvable:$true] %s25
      %31 = dma.hbm_to_vmem [thread:$0]  %s1, 1536, %s26, [#allocation6], 128, 128, 8
    $region9: #{tpu_custom_call.1} parent=1 // pred_fallthru
      _
    // Predicated region
    $region10: #{tpu_custom_call.1} parent=1 // pred_check
      _
    $region11: #{tpu_custom_call.1} parent=1 // pred_check_branch
      %33 = sbr.rel (0) target = $region13
    $region12: #{tpu_custom_call.1} parent=1 // pred_region
      %34 = dma.done [#allocation3], 128
    $region13: #{tpu_custom_call.1} parent=1 // pred_fallthru
      _
    // Predicated region
    $region14: #{tpu_custom_call.1} parent=1 // pred_check
      _
    $region15: #{tpu_custom_call.1} parent=1 // pred_check_branch
      %36 = sbr.rel (0) target = $region17
    $region16: #{tpu_custom_call.1} parent=1 // pred_region
      %37 = dma.done [#allocation6], 1536
    $region17: #{tpu_custom_call.1} parent=1 // pred_fallthru
      _
    %v38 = vld [vmem:[#allocation2] sm:$0xff]
    %v39 = vld [vmem:[#allocation5] sm:$0xff]
    %v40 = vld [vmem:[#allocation5 + $0x8] sm:$0xff]
    %v41 = vld [vmem:[#allocation5 + $0x10] sm:$0xff]
    %v42 = vld [vmem:[#allocation5 + $0x18] sm:$0xff]
    %v43 = vld [vmem:[#allocation5 + $0x58] sm:$0x1]
    %v44 = vlaneseq
    %v45 = vshrl.u32 %v44, 7
    %v46 = vsub.s32 0, %v45
    %v47 = vrot.slane %v43, %v46
    %vm48 = vcmask 261120
    %v50 = vsel %vm48, %v38, 0
    %52 = vmatprep.subr.mxu0 0.0
    %53 = vmatpush1.msra.mxu0 %v39
    %54 = vmatprep.subr.mxu0 0.0
    %55 = vmatpush1.msra.mxu0 %v40
    %56 = vmatprep.subr.mxu0 0.0
    %57 = vmatpush1.msra.mxu0 %v41
    %58 = vmatprep.subr.mxu0 0.0
    %59 = vmatpush1.msra.mxu0 %v42
    %60 = vmatprep.subr.mxu0 0.0
    %61 = vmatpush1.msra.mxu0 0.0
    %62 = vmatprep.subr.mxu0 0.0
    %63 = vmatpush1.msra.mxu0 0.0
    %64 = vmatprep.subr.mxu0 0.0
    %65 = vmatpush1.msra.mxu0 0.0
    %66 = vmatprep.subr.mxu0 0.0
    %67 = vmatpush1.msra.mxu0 0.0
    %68 = vmatprep.subr.mxu0 0.0
    %69 = vmatpush1.msra.mxu0 0.0
    %70 = vmatprep.subr.mxu0 0.0
    %71 = vmatpush1.msra.mxu0 0.0
    %72 = vmatprep.subr.mxu0 0.0
    %73 = vmatpush1.msra.mxu0 0.0
    %74 = vmatprep.subr.mxu0 0.0
    %75 = vmatpush1.msra.mxu0 0.0
    %76 = vmatprep.subr.mxu0 0.0
    %77 = vmatpush1.msra.mxu0 0.0
    %78 = vmatprep.subr.mxu0 0.0
    %79 = vmatpush1.msra.mxu0 0.0
    %80 = vmatprep.subr.mxu0 0.0
    %81 = vmatpush1.msra.mxu0 0.0
    %82 = vmatprep.subr.mxu0 0.0
    %83 = vmatpush1.msra.mxu0 0.0
    %84 = vmatprep.subr.mxu0 0.0
    %85 = vmatpush1.msra.mxu0 0.0
    %86 = vmatprep.subr.mxu0 0.0
    %87 = vmatpush1.msra.mxu0 0.0
    %88 = vmatprep.subr.mxu0 0.0
    %89 = vmatpush1.msra.mxu0 0.0
    %90 = vmatprep.subr.mxu0 0.0
    %91 = vmatpush1.msra.mxu0 0.0
    %92 = vmatprep.subr.mxu0 0.0
    %93 = vmatpush1.msra.mxu0 0.0
    %94 = vmatprep.subr.mxu0 0.0
    %95 = vmatpush1.msra.mxu0 0.0
    %96 = vmatprep.subr.mxu0 0.0
    %97 = vmatpush1.msra.mxu0 0.0
    %98 = vmatprep.subr.mxu0 0.0
    %99 = vmatpush1.msra.mxu0 0.0
    %100 = vmatprep.subr.mxu0 0.0
    %101 = vmatpush1.msra.mxu0 0.0
    %102 = vmatprep.subr.mxu0 0.0
    %103 = vmatpush1.msra.mxu0 0.0
    %104 = vmatprep.subr.mxu0 0.0
    %105 = vmatpush1.msra.mxu0 0.0
    %106 = vmatprep.subr.mxu0 0.0
    %107 = vmatpush1.msra.mxu0 0.0
    %108 = vmatprep.subr.mxu0 0.0
    %109 = vmatpush1.msra.mxu0 0.0
    %110 = vmatprep.subr.mxu0 0.0
    %111 = vmatpush1.msra.mxu0 0.0
    %112 = vmatprep.subr.mxu0 0.0
    %113 = vmatpush1.msra.mxu0 0.0
    %114 = vmatprep.subr.mxu0 0.0
    %115 = vmatpush1.msra.mxu0 0.0
    %116 = vmatprep.mubr.f32.mxu0 0.0
    %117 = vmatmul.mubr.f32.gmra.mrb[0].mxu0 %v50
    %v118 = vpop.f32.mrb[0].mxu0
    %v119 = vadd.f32 %v47, %v118
    %v120 = vpop.f32.mrb[0].mxu0
    %121 = vdwg.mxu0
    %v122 = vmax.f32 %v119, 0.0
    %v123 = vand.u32 2147483647, %v119
    %v124 = vsub.f32 0.0, %v123
    %v125 = vmul.f32 %v124, 1.442695
    %v126 = vpow.pop %v125
    %v127 = vadd.f32 %v126, 1.0
    %v128 = vlog2.pop %v127
    %v129 = vmul.f32 %v128, 0.6931472
    %v130 = vmul.f32 -0.5, %v126
    %v131 = vadd.f32 %v130, 1.0
    %v132 = vmul.f32 %v131, %v126
    %v133 = vand.u32 2147483647, %v126
    %vm134 = vcmp.lt.f32.partialorder %v133, 0.0004427343
    %v135 = vsel %vm134, %v132, %v129
    %v136 = vmin.f32 %v119, 0.0
    %v137 = vsub.f32 %v136, %v135
    %v138 = vsub.f32 0.0, %v119
    %v139 = vmin.f32 %v138, 0.0
    %v140 = vsub.f32 %v139, %v135
    %v141 = vld [vmem:[#allocation5 + $0x20] sm:$0x7f]
    %v142 = vld [vmem:[#allocation5 + $0x28] sm:$0x7f]
    %vm143 = vcmask 56320
    %v145 = vsel %vm143, %v140, 0
    %vm147 = vcmask 1046528
    %v149 = vsel %vm147, %v142, 0
    %151 = vmatprep.subr.mxu0 0.0
    %152 = vmatpush1.msra.mxu0 %v149
    %153 = vmatprep.subr.mxu0 0.0
    %154 = vmatpush1.msra.mxu0 0.0
    %155 = vmatprep.subr.mxu0 0.0
    %156 = vmatpush1.msra.mxu0 0.0
    %157 = vmatprep.subr.mxu0 0.0
    %158 = vmatpush1.msra.mxu0 0.0
    %159 = vmatprep.subr.mxu0 0.0
    %160 = vmatpush1.msra.mxu0 0.0
    %161 = vmatprep.subr.mxu0 0.0
    %162 = vmatpush1.msra.mxu0 0.0
    %163 = vmatprep.subr.mxu0 0.0
    %164 = vmatpush1.msra.mxu0 0.0
    %165 = vmatprep.subr.mxu0 0.0
    %166 = vmatpush1.msra.mxu0 0.0
    %167 = vmatprep.subr.mxu0 0.0
    %168 = vmatpush1.msra.mxu0 0.0
    %169 = vmatprep.subr.mxu0 0.0
    %170 = vmatpush1.msra.mxu0 0.0
    %171 = vmatprep.subr.mxu0 0.0
    %172 = vmatpush1.msra.mxu0 0.0
    %173 = vmatprep.subr.mxu0 0.0
    %174 = vmatpush1.msra.mxu0 0.0
    %175 = vmatprep.subr.mxu0 0.0
    %176 = vmatpush1.msra.mxu0 0.0
    %177 = vmatprep.subr.mxu0 0.0
    %178 = vmatpush1.msra.mxu0 0.0
    %179 = vmatprep.subr.mxu0 0.0
    %180 = vmatpush1.msra.mxu0 0.0
    %181 = vmatprep.subr.mxu0 0.0
    %182 = vmatpush1.msra.mxu0 0.0
    %183 = vmatprep.subr.mxu0 0.0
    %184 = vmatpush1.msra.mxu0 0.0
    %185 = vmatprep.subr.mxu0 0.0
    %186 = vmatpush1.msra.mxu0 0.0
    %187 = vmatprep.subr.mxu0 0.0
    %188 = vmatpush1.msra.mxu0 0.0
    %189 = vmatprep.subr.mxu0 0.0
    %190 = vmatpush1.msra.mxu0 0.0
    %191 = vmatprep.subr.mxu0 0.0
    %192 = vmatpush1.msra.mxu0 0.0
    %193 = vmatprep.subr.mxu0 0.0
    %194 = vmatpush1.msra.mxu0 0.0
    %195 = vmatprep.subr.mxu0 0.0
    %196 = vmatpush1.msra.mxu0 0.0
    %197 = vmatprep.subr.mxu0 0.0
    %198 = vmatpush1.msra.mxu0 0.0
    %199 = vmatprep.subr.mxu0 0.0
    %200 = vmatpush1.msra.mxu0 0.0
    %201 = vmatprep.subr.mxu0 0.0
    %202 = vmatpush1.msra.mxu0 0.0
    %203 = vmatprep.subr.mxu0 0.0
    %204 = vmatpush1.msra.mxu0 0.0
    %205 = vmatprep.subr.mxu0 0.0
    %206 = vmatpush1.msra.mxu0 0.0
    %207 = vmatprep.subr.mxu0 0.0
    %208 = vmatpush1.msra.mxu0 0.0
    %209 = vmatprep.subr.mxu0 0.0
    %210 = vmatpush1.msra.mxu0 0.0
    %211 = vmatprep.subr.mxu0 0.0
    %212 = vmatpush1.msra.mxu0 0.0
    %213 = vmatprep.subr.mxu0 0.0
    %214 = vmatpush1.msra.mxu0 0.0
    %215 = vmatprep.mubr.f32.mxu0 0.0
    %216 = vmatmul.mubr.f32.gmra.mrb[0].mxu0 %v145
    %v217 = vpop.f32.mrb[0].mxu0
    %v218 = vadd.f32 0.0, %v217
    %v219 = vpop.f32.mrb[0].mxu0
    %220 = vdwg.mxu0
    %v222 = vsel %vm143, %v137, 0
    %v225 = vsel %vm147, %v141, 0
    %227 = vmatprep.subr.mxu0 0.0
    %228 = vmatpush1.msra.mxu0 %v225
    %229 = vmatprep.subr.mxu0 0.0
    %230 = vmatpush1.msra.mxu0 0.0
    %231 = vmatprep.subr.mxu0 0.0
    %232 = vmatpush1.msra.mxu0 0.0
    %233 = vmatprep.subr.mxu0 0.0
    %234 = vmatpush1.msra.mxu0 0.0
    %235 = vmatprep.subr.mxu0 0.0
    %236 = vmatpush1.msra.mxu0 0.0
    %237 = vmatprep.subr.mxu0 0.0
    %238 = vmatpush1.msra.mxu0 0.0
    %239 = vmatprep.subr.mxu0 0.0
    %240 = vmatpush1.msra.mxu0 0.0
    %241 = vmatprep.subr.mxu0 0.0
    %242 = vmatpush1.msra.mxu0 0.0
    %243 = vmatprep.subr.mxu0 0.0
    %244 = vmatpush1.msra.mxu0 0.0
    %245 = vmatprep.subr.mxu0 0.0
    %246 = vmatpush1.msra.mxu0 0.0
    %247 = vmatprep.subr.mxu0 0.0
    %248 = vmatpush1.msra.mxu0 0.0
    %249 = vmatprep.subr.mxu0 0.0
    %250 = vmatpush1.msra.mxu0 0.0
    %251 = vmatprep.subr.mxu0 0.0
    %252 = vmatpush1.msra.mxu0 0.0
    %253 = vmatprep.subr.mxu0 0.0
    %254 = vmatpush1.msra.mxu0 0.0
    %255 = vmatprep.subr.mxu0 0.0
    %256 = vmatpush1.msra.mxu0 0.0
    %257 = vmatprep.subr.mxu0 0.0
    %258 = vmatpush1.msra.mxu0 0.0
    %259 = vmatprep.subr.mxu0 0.0
    %260 = vmatpush1.msra.mxu0 0.0
    %261 = vmatprep.subr.mxu0 0.0
    %262 = vmatpush1.msra.mxu0 0.0
    %263 = vmatprep.subr.mxu0 0.0
    %264 = vmatpush1.msra.mxu0 0.0
    %265 = vmatprep.subr.mxu0 0.0
    %266 = vmatpush1.msra.mxu0 0.0
    %267 = vmatprep.subr.mxu0 0.0
    %268 = vmatpush1.msra.mxu0 0.0
    %269 = vmatprep.subr.mxu0 0.0
    %270 = vmatpush1.msra.mxu0 0.0
    %271 = vmatprep.subr.mxu0 0.0
    %272 = vmatpush1.msra.mxu0 0.0
    %273 = vmatprep.subr.mxu0 0.0
    %274 = vmatpush1.msra.mxu0 0.0
    %275 = vmatprep.subr.mxu0 0.0
    %276 = vmatpush1.msra.mxu0 0.0
    %277 = vmatprep.subr.mxu0 0.0
    %278 = vmatpush1.msra.mxu0 0.0
    %279 = vmatprep.subr.mxu0 0.0
    %280 = vmatpush1.msra.mxu0 0.0
    %281 = vmatprep.subr.mxu0 0.0
    %282 = vmatpush1.msra.mxu0 0.0
    %283 = vmatprep.subr.mxu0 0.0
    %284 = vmatpush1.msra.mxu0 0.0
    %285 = vmatprep.subr.mxu0 0.0
    %286 = vmatpush1.msra.mxu0 0.0
    %287 = vmatprep.subr.mxu0 0.0
    %288 = vmatpush1.msra.mxu0 0.0
    %289 = vmatprep.subr.mxu0 0.0
    %290 = vmatpush1.msra.mxu0 0.0
    %291 = vmatprep.mubr.f32.mxu0 0.0
    %292 = vmatmul.mubr.f32.gmra.mrb[0].mxu0 %v222
    %v293 = vpop.f32.mrb[0].mxu0
    %v294 = vadd.f32 %v218, %v293
    %v295 = vpop.f32.mrb[0].mxu0
    %296 = vdwg.mxu0
    %v297 = vmul.f32 %v294, 1.442695
    %v298 = vpow.pop %v297
    %v299 = vld [vmem:[#allocation5 + $0x30] sm:$0xff]
    %v300 = vld [vmem:[#allocation5 + $0x38] sm:$0xff]
    %v301 = vld [vmem:[#allocation5 + $0x40] sm:$0xff]
    %v302 = vld [vmem:[#allocation5 + $0x48] sm:$0xff]
    %v303 = vld [vmem:[#allocation5 + $0x50] sm:$0xff]
    %v304 = vld [vmem:[#allocation5 + $0x59] sm:$0x1]
    %306 = vrot.lane.b32.xlu0 %v122, 121
    %v307 = vpop.permute.xlu0 %306
    %v308 = vsel %vm48, %v307, 0
    %310 = vmatprep.subr.mxu0 0.0
    %311 = vmatpush1.msra.mxu0 %v300
    %312 = vmatprep.subr.mxu0 0.0
    %313 = vmatpush1.msra.mxu0 %v301
    %314 = vmatprep.subr.mxu0 0.0
    %315 = vmatpush1.msra.mxu0 %v302
    %316 = vmatprep.subr.mxu0 0.0
    %317 = vmatpush1.msra.mxu0 %v303
    %318 = vmatprep.subr.mxu0 0.0
    %319 = vmatpush1.msra.mxu0 0.0
    %320 = vmatprep.subr.mxu0 0.0
    %321 = vmatpush1.msra.mxu0 0.0
    %322 = vmatprep.subr.mxu0 0.0
    %323 = vmatpush1.msra.mxu0 0.0
    %324 = vmatprep.subr.mxu0 0.0
    %325 = vmatpush1.msra.mxu0 0.0
    %326 = vmatprep.subr.mxu0 0.0
    %327 = vmatpush1.msra.mxu0 0.0
    %328 = vmatprep.subr.mxu0 0.0
    %329 = vmatpush1.msra.mxu0 0.0
    %330 = vmatprep.subr.mxu0 0.0
    %331 = vmatpush1.msra.mxu0 0.0
    %332 = vmatprep.subr.mxu0 0.0
    %333 = vmatpush1.msra.mxu0 0.0
    %334 = vmatprep.subr.mxu0 0.0
    %335 = vmatpush1.msra.mxu0 0.0
    %336 = vmatprep.subr.mxu0 0.0
    %337 = vmatpush1.msra.mxu0 0.0
    %338 = vmatprep.subr.mxu0 0.0
    %339 = vmatpush1.msra.mxu0 0.0
    %340 = vmatprep.subr.mxu0 0.0
    %341 = vmatpush1.msra.mxu0 0.0
    %342 = vmatprep.subr.mxu0 0.0
    %343 = vmatpush1.msra.mxu0 0.0
    %344 = vmatprep.subr.mxu0 0.0
    %345 = vmatpush1.msra.mxu0 0.0
    %346 = vmatprep.subr.mxu0 0.0
    %347 = vmatpush1.msra.mxu0 0.0
    %348 = vmatprep.subr.mxu0 0.0
    %349 = vmatpush1.msra.mxu0 0.0
    %350 = vmatprep.subr.mxu0 0.0
    %351 = vmatpush1.msra.mxu0 0.0
    %352 = vmatprep.subr.mxu0 0.0
    %353 = vmatpush1.msra.mxu0 0.0
    %354 = vmatprep.subr.mxu0 0.0
    %355 = vmatpush1.msra.mxu0 0.0
    %356 = vmatprep.subr.mxu0 0.0
    %357 = vmatpush1.msra.mxu0 0.0
    %358 = vmatprep.subr.mxu0 0.0
    %359 = vmatpush1.msra.mxu0 0.0
    %360 = vmatprep.subr.mxu0 0.0
    %361 = vmatpush1.msra.mxu0 0.0
    %362 = vmatprep.subr.mxu0 0.0
    %363 = vmatpush1.msra.mxu0 0.0
    %364 = vmatprep.subr.mxu0 0.0
    %365 = vmatpush1.msra.mxu0 0.0
    %366 = vmatprep.subr.mxu0 0.0
    %367 = vmatpush1.msra.mxu0 0.0
    %368 = vmatprep.subr.mxu0 0.0
    %369 = vmatpush1.msra.mxu0 0.0
    %370 = vmatprep.subr.mxu0 0.0
    %371 = vmatpush1.msra.mxu0 0.0
    %372 = vmatprep.subr.mxu0 0.0
    %373 = vmatpush1.msra.mxu0 0.0
    %374 = vmatprep.mubr.f32.mxu0 0.0
    %375 = vmatmul.mubr.f32.gmra.mrb[0].mxu0 %v308
    %v376 = vpop.f32.mrb[0].mxu0
    %v377 = vadd.f32 0.0, %v376
    %v378 = vpop.f32.mrb[0].mxu0
    %379 = vdwg.mxu0
    %vm380 = vcmask 64512
    %v382 = vsel %vm380, %v298, 0
    %384 = vmatprep.subr.mxu0 0.0
    %385 = vmatpush1.msra.mxu0 %v299
    %386 = vmatprep.subr.mxu0 0.0
    %387 = vmatpush1.msra.mxu0 0.0
    %388 = vmatprep.subr.mxu0 0.0
    %389 = vmatpush1.msra.mxu0 0.0
    %390 = vmatprep.subr.mxu0 0.0
    %391 = vmatpush1.msra.mxu0 0.0
    %392 = vmatprep.subr.mxu0 0.0
    %393 = vmatpush1.msra.mxu0 0.0
    %394 = vmatprep.subr.mxu0 0.0
    %395 = vmatpush1.msra.mxu0 0.0
    %396 = vmatprep.subr.mxu0 0.0
    %397 = vmatpush1.msra.mxu0 0.0
    %398 = vmatprep.subr.mxu0 0.0
    %399 = vmatpush1.msra.mxu0 0.0
    %400 = vmatprep.subr.mxu0 0.0
    %401 = vmatpush1.msra.mxu0 0.0
    %402 = vmatprep.subr.mxu0 0.0
    %403 = vmatpush1.msra.mxu0 0.0
    %404 = vmatprep.subr.mxu0 0.0
    %405 = vmatpush1.msra.mxu0 0.0
    %406 = vmatprep.subr.mxu0 0.0
    %407 = vmatpush1.msra.mxu0 0.0
    %408 = vmatprep.subr.mxu0 0.0
    %409 = vmatpush1.msra.mxu0 0.0
    %410 = vmatprep.subr.mxu0 0.0
    %411 = vmatpush1.msra.mxu0 0.0
    %412 = vmatprep.subr.mxu0 0.0
    %413 = vmatpush1.msra.mxu0 0.0
    %414 = vmatprep.subr.mxu0 0.0
    %415 = vmatpush1.msra.mxu0 0.0
    %416 = vmatprep.subr.mxu0 0.0
    %417 = vmatpush1.msra.mxu0 0.0
    %418 = vmatprep.subr.mxu0 0.0
    %419 = vmatpush1.msra.mxu0 0.0
    %420 = vmatprep.subr.mxu0 0.0
    %421 = vmatpush1.msra.mxu0 0.0
    %422 = vmatprep.subr.mxu0 0.0
    %423 = vmatpush1.msra.mxu0 0.0
    %424 = vmatprep.subr.mxu0 0.0
    %425 = vmatpush1.msra.mxu0 0.0
    %426 = vmatprep.subr.mxu0 0.0
    %427 = vmatpush1.msra.mxu0 0.0
    %428 = vmatprep.subr.mxu0 0.0
    %429 = vmatpush1.msra.mxu0 0.0
    %430 = vmatprep.subr.mxu0 0.0
    %431 = vmatpush1.msra.mxu0 0.0
    %432 = vmatprep.subr.mxu0 0.0
    %433 = vmatpush1.msra.mxu0 0.0
    %434 = vmatprep.subr.mxu0 0.0
    %435 = vmatpush1.msra.mxu0 0.0
    %436 = vmatprep.subr.mxu0 0.0
    %437 = vmatpush1.msra.mxu0 0.0
    %438 = vmatprep.subr.mxu0 0.0
    %439 = vmatpush1.msra.mxu0 0.0
    %440 = vmatprep.subr.mxu0 0.0
    %441 = vmatpush1.msra.mxu0 0.0
    %442 = vmatprep.subr.mxu0 0.0
    %443 = vmatpush1.msra.mxu0 0.0
    %444 = vmatprep.subr.mxu0 0.0
    %445 = vmatpush1.msra.mxu0 0.0
    %446 = vmatprep.subr.mxu0 0.0
    %447 = vmatpush1.msra.mxu0 0.0
    %448 = vmatprep.mubr.f32.mxu0 0.0
    %449 = vmatmul.mubr.f32.gmra.mrb[0].mxu0 %v382
    %v450 = vpop.f32.mrb[0].mxu0
    %v451 = vadd.f32 %v377, %v450
    %v452 = vpop.f32.mrb[0].mxu0
    %453 = vdwg.mxu0
    %v454 = vlaneseq
    %v455 = vshrl.u32 %v454, 7
    %v456 = vsub.s32 0, %v455
    %v457 = vrot.slane %v304, %v456
    %v458 = vadd.f32 %v451, %v457
    %v459 = vlaneseq
    %v460 = vand.u32 %v459, 127
    %v461 = vsel %vm380, %v298, -inf
    %462 = vmax.xlane.f32.xlu0 %v461
    %v463 = vpop.xlane.xlu0 %462
    %vm464 = vcmp.ge.f32.partialorder %v298, %v463
    %v465 = vsel %vm464, %v460, 8
    %v466 = vsel %vm380, %v465, 2147483647
    %v467 = vand.u32 %v466, 65535
    %v468 = vshra.s32 %v466, 16
    %v469 = vcvt.s32.f32 %v467
    %v470 = vcvt.s32.f32 %v468
    %471 = vmin.xlane.f32.xlu0 %v470
    %v472 = vpop.xlane.xlu0 %471
    %vm473 = vcmp.eq.f32.partialorder %v470, %v472
    %v474 = vsel %vm473, %v469, inf
    %475 = vmin.xlane.f32.xlu0 %v474
    %v476 = vpop.xlane.xlu0 %475
    %v477 = vcvt.f32.s32 %v476
    %v478 = vcvt.f32.s32 %v472
    %v479 = vshll.u32 %v478, 16
    %v480 = vadd.s32 %v479, %v477
    %v481 = vcvt.s32.f32 %v480
    %482 = vrot.lane.b32.xlu0 %v298, 5
    %v483 = vpop.permute.xlu0 %482
    %vm485 = vcmask 39936
    %v486 = vsel %vm485, %v458, %v483
    %vm487 = vcmask 105472
    %v488 = vsel %vm487, %v486, %v481
    %vm489 = vcmask 113664
    %v490 = vsel %vm489, %v488, 0.0
    %491 = vst [vmem:[#allocation7] sm:$0xff] %v490
    // Predicated region
    $region18: #{tpu_custom_call.1} parent=1 // pred_check
      _
    $region19: #{tpu_custom_call.1} parent=1 // pred_check_branch
      %493 = sbr.rel (0) target = $region21
    $region20: #{tpu_custom_call.1} parent=1 // pred_region
      %s495 = ssub.s32 128, 128
      %496 = vsyncadd [#allocation4], %s495
      %s498 = sshll.u32 [#allocation7], 4
      %s499 = int_to_ptr.vmem [resolvable:$true] %s498
      %501 = dma.vmem_to_hbm [thread:$0]  %s499, 128, %s2, [#allocation4]
    $region21: #{tpu_custom_call.1} parent=1 // pred_fallthru
      _
    // Predicated region
    $region22: #{tpu_custom_call.1} parent=1 // pred_check
      _
    $region23: #{tpu_custom_call.1} parent=1 // pred_check_branch
      %503 = sbr.rel (0) target = $region25
    $region24: #{tpu_custom_call.1} parent=1 // pred_region
      %504 = dma.done [#allocation4], 128
    $region25: #{tpu_custom_call.1} parent=1 // pred_fallthru
      _
    %505 = vsyncpa [#allocation3], 1
    %506 = vsyncpa [#allocation6], 1
    %507 = vsyncpa [#allocation4], 1

</llo_original>
